<compile_context>
chip_gen: v6e
topology: v6e:2x2x1
jax: 0.10.0
libtpu: 0.0.40
codegen_flags: <defaults>
</compile_context>

<pallas_src>
import functools

import jax
import jax.numpy as jnp
from jax.experimental import pallas as pl
from jax.experimental.pallas import tpu as pltpu


def _round_up(x, m):
    return ((x + m - 1) // m) * m


def _maxout_lane_kernel(x_ref, o_ref, *, pool_size, hw):
    # x_ref: (TILE_R, pool_size * hw); o_ref: (TILE_R, hw).
    # Lane-aligned static slices + pairwise maximum: dense vregs, VPU only.
    acc = x_ref[:, 0:hw]
    for p in range(1, pool_size):
        acc = jnp.maximum(acc, x_ref[:, p * hw:(p + 1) * hw])
    o_ref[...] = acc


def _maxout_sublane_kernel(x_ref, o_ref, *, pool_size):
    # x_ref: (TILE_R, pool_size, hw); o_ref: (TILE_R, hw).
    acc = x_ref[:, 0, :]
    for p in range(1, pool_size):
        acc = jnp.maximum(acc, x_ref[:, p, :])
    o_ref[...] = acc


def maxout(x, pool_size):
    """Maxout over the channel dim (axis 1) of an (N, C, *spatial) tensor."""
    assert x.shape[1] % pool_size == 0, (
        "Wrong input channel dim size ({}) for Maxout({})".format(
            x.shape[1], pool_size
        )
    )
    N = x.shape[0]
    C = x.shape[1]
    spatial = x.shape[2:]
    c_out = C // pool_size
    hw = 1
    for s in spatial:
        hw *= s

    R = N * c_out
    dsize = jnp.dtype(x.dtype).itemsize
    row_in_bytes = pool_size * hw * dsize

    # --- Tile-size selection -------------------------------------------------
    # Target a few-MiB input block per grid step; keep double-buffered
    # footprint small enough for v7x's 64 MiB VMEM.
    target_in_block_bytes = 4 * 1024 * 1024
    if R < 8:
        tile_r = R  # full-dim block (legal for any size)
    else:
        tile_r = max(8, (target_in_block_bytes // max(row_in_bytes, 1)) // 8 * 8)
        tile_r = min(tile_r, _round_up(R, 8))
        # Keep >= 2 grid steps when there is enough work so both v7x
        # TensorCores get a share of the "parallel" row axis.
        if R > 8 and pl.cdiv(R, tile_r) < 2:
            tile_r = max(8, _round_up(pl.cdiv(R, 2), 8))

    num_blocks = pl.cdiv(R, tile_r)

    in_block_bytes = tile_r * row_in_bytes
    out_block_bytes = tile_r * hw * dsize
    vmem_needed = 2 * (in_block_bytes + out_block_bytes)  # double-buffered
    vmem_limit_bytes = int(
        min(max(32 * 1024 * 1024, 2 * vmem_needed), 48 * 1024 * 1024)
    )

    cost = pl.CostEstimate(
        flops=max(pool_size - 1, 0) * R * hw,
        transcendentals=0,
        bytes_accessed=(R * pool_size * hw + R * hw) * dsize,
    )

    if hw % 128 == 0:
        # Lane-dense path: pool groups are contiguous lane chunks of each row.
        x_k = x.reshape(R, pool_size * hw)
        kernel = functools.partial(
            _maxout_lane_kernel, pool_size=pool_size, hw=hw
        )
        in_specs = [
            pl.BlockSpec((tile_r, pool_size * hw), lambda i: (i, 0)),
        ]
    else:
        # Fallback: keep the pool axis explicit (full-dim block stays legal).
        x_k = x.reshape(R, pool_size, hw)
        kernel = functools.partial(_maxout_sublane_kernel, pool_size=pool_size)
        in_specs = [
            pl.BlockSpec((tile_r, pool_size, hw), lambda i: (i, 0, 0)),
        ]

    out = pl.pallas_call(
        kernel,
        out_shape=jax.ShapeDtypeStruct((R, hw), x.dtype),
        grid_spec=pltpu.PrefetchScalarGridSpec(
            num_scalar_prefetch=0,
            grid=(num_blocks,),
            in_specs=in_specs,
            out_specs=pl.BlockSpec((tile_r, hw), lambda i: (i, 0)),
        ),
        compiler_params=pltpu.CompilerParams(
            dimension_semantics=("parallel",),
            vmem_limit_bytes=vmem_limit_bytes,
        ),
        cost_estimate=cost,
    )(x_k)

    return out.reshape((N, c_out) + spatial)


if __name__ == "__main__":
    pool_size = 2
    # Small NCHW input consistent with the module: batch=2, channels=8,
    # spatial=16x16 (channels divisible by pool_size).
    key = jax.random.PRNGKey(0)
    x = jax.random.normal(key, (2, 8, 16, 16), dtype=jnp.float32)

    y = maxout(x, pool_size)
    y = jax.block_until_ready(y)

    # Reference (plain JAX, mirrors the PyTorch view + max(dim=2)).
    ref = jnp.max(
        x.reshape(x.shape[0], x.shape[1] // pool_size, pool_size, *x.shape[2:]),
        axis=2,
    )
    assert y.shape == ref.shape, (y.shape, ref.shape)
    assert jnp.allclose(y, ref), "Pallas Maxout mismatch vs reference"

    print("KERNEL_OK")
</pallas_src>

<mosaic_0001>
module attributes {stable_mosaic.version = 11 : i64} {
  func.func @_maxout_lane_kernel(%arg0: i32, %arg1: memref<8x512xf32, #tpu.memory_space<vmem>>, %arg2: memref<8x256xf32, #tpu.memory_space<vmem>>) attributes {dimension_semantics = [#tpu.dimension_semantics<parallel>], iteration_bounds = array<i64: 1>, scalar_prefetch = 0 : i64, scratch_operands = 0 : i64, tpu.core_type = #tpu.core_type<tc>, window_params = [{transform_indices = @transform_0, window_bounds = array<i64: 8, 512>}, {transform_indices = @transform_1, window_bounds = array<i64: 8, 256>}]} {
    %c0 = arith.constant 0 : index
    %c0_0 = arith.constant 0 : index
    %0 = vector.load %arg1[%c0, %c0_0] : memref<8x512xf32, #tpu.memory_space<vmem>>, vector<8x256xf32>
    %c0_1 = arith.constant 0 : index
    %c256 = arith.constant 256 : index
    %1 = vector.load %arg1[%c0_1, %c256] : memref<8x512xf32, #tpu.memory_space<vmem>>, vector<8x256xf32>
    %2 = arith.maximumf %0, %1 : vector<8x256xf32>
    %c0_2 = arith.constant 0 : index
    %c0_3 = arith.constant 0 : index
    %3 = vector.load %arg2[%c0_2, %c0_3] : memref<8x256xf32, #tpu.memory_space<vmem>>, vector<8x256xf32>
    tpu.vector_store %arg2[%c0_2, %c0_3], %2 {strides = array<i32>} : memref<8x256xf32, #tpu.memory_space<vmem>>, vector<8x256xf32>,
    return
  }
  func.func @transform_0(%arg0: i32) -> (i32, i32) {
    %c0_i32 = arith.constant 0 : i32
    %c0_i32_0 = arith.constant 0 : i32
    return %arg0, %c0_i32 : i32, i32
  }
  func.func @transform_1(%arg0: i32) -> (i32, i32) {
    %c0_i32 = arith.constant 0 : i32
    %c0_i32_0 = arith.constant 0 : i32
    return %arg0, %c0_i32 : i32, i32
  }
}

</mosaic_0001>

<llo_original>
// kernel: tpu_custom_call.1
$region0: #{tpu_custom_call.1}
  #allocation0 [shape = 'u32[]', space=smem, size = 0x4, offset = 0x4, fixed_abs, tag = 'smem constant byte address 0x4 - core index']
  #allocation1 [shape = 'u32[144,128]{1,0:T(1,128)}', space=vmem, size = 0x12000, scoped, tag = 'internal scratch']
  %s0 = inlined_call_operand.hbm [shape: f32[8,512], index: 0, kind: input, shape index: {}]
  %s1 = inlined_call_operand.hbm [shape: f32[8,256], index: 1, kind: output, shape index: {}]
  %s2 = sld [smem:[#allocation0]]
  $region18: #{tpu_custom_call.1} parent=0
    _
  %s4 = ssub.s32 1, %s2
  %s5 = scalar_select 0, %s4, %s2
  $region1: #{tpu_custom_call.1} parent=0
    #allocation2 [shape = 'u8[16384]{0}', space=vmem, size = 0x4000, scoped, tag = 'input window, operand 0, single buffered']
    #allocation3 [shape = 's32[1]{0}', space=sflag, size = 0x4, scoped, tag = 'scoped memory for tpu_custom_call.1']
    #allocation4 [shape = 's32[1]{0}', space=sflag, size = 0x4, scoped, tag = 'scoped memory for tpu_custom_call.1']
    #allocation5 [shape = 'u8[8192]{0}', space=vmem, size = 0x2000, scoped, tag = 'output window, operand 0, single buffered']
    %6 = vsyncpa [#allocation3], 0
    %7 = vsyncpa [#allocation4], 0
    // Predicated region
    $region2: #{tpu_custom_call.1} parent=1 // pred_check
      _
    $region3: #{tpu_custom_call.1} parent=1 // pred_check_branch
      %9 = sbr.rel (0) target = $region5
    $region4: #{tpu_custom_call.1} parent=1 // pred_region
      %s11 = ssub.s32 512, 512
      %12 = vsyncadd [#allocation3], %s11
      %s14 = sshll.u32 [#allocation2], 4
      %s15 = int_to_ptr.vmem [resolvable:$true] %s14
      %17 = dma.hbm_to_vmem [thread:$0]  %s0, 512, %s15, [#allocation3]
    $region5: #{tpu_custom_call.1} parent=1 // pred_fallthru
      _
    // Predicated region
    $region6: #{tpu_custom_call.1} parent=1 // pred_check
      _
    $region7: #{tpu_custom_call.1} parent=1 // pred_check_branch
      %19 = sbr.rel (0) target = $region9
    $region8: #{tpu_custom_call.1} parent=1 // pred_region
      %20 = dma.done [#allocation3], 512
    $region9: #{tpu_custom_call.1} parent=1 // pred_fallthru
      _
    %v21 = vld [vmem:[#allocation2] sm:$0xff]
    %v22 = vld [vmem:[#allocation2 + $0x8] sm:$0xff]
    %v23 = vld [vmem:[#allocation2 + $0x10] sm:$0xff]
    %v24 = vld [vmem:[#allocation2 + $0x18] sm:$0xff]
    %v25 = vmax.f32 %v21, %v23
    %v26 = vmax.f32 %v22, %v24
    %27 = vst [vmem:[#allocation5] sm:$0xff] %v25
    %28 = vst [vmem:[#allocation5 + $0x8] sm:$0xff] %v26
    // Predicated region
    $region10: #{tpu_custom_call.1} parent=1 // pred_check
      _
    $region11: #{tpu_custom_call.1} parent=1 // pred_check_branch
      %30 = sbr.rel (0) target = $region13
    $region12: #{tpu_custom_call.1} parent=1 // pred_region
      %s32 = ssub.s32 256, 256
      %33 = vsyncadd [#allocation4], %s32
      %s35 = sshll.u32 [#allocation5], 4
      %s36 = int_to_ptr.vmem [resolvable:$true] %s35
      %38 = dma.vmem_to_hbm [thread:$0]  %s36, 256, %s1, [#allocation4]
    $region13: #{tpu_custom_call.1} parent=1 // pred_fallthru
      _
    // Predicated region
    $region14: #{tpu_custom_call.1} parent=1 // pred_check
      _
    $region15: #{tpu_custom_call.1} parent=1 // pred_check_branch
      %40 = sbr.rel (0) target = $region17
    $region16: #{tpu_custom_call.1} parent=1 // pred_region
      %41 = dma.done [#allocation4], 256
    $region17: #{tpu_custom_call.1} parent=1 // pred_fallthru
      _
    %42 = vsyncpa [#allocation3], 1
    %43 = vsyncpa [#allocation4], 1

</llo_original>
